<compile_context>
chip_gen: v7x
topology: tpu7x:2x2x1
jax: 0.10.0
libtpu: 0.0.40
codegen_flags: <defaults>
</compile_context>

<pallas_src>
import functools

import jax
import jax.numpy as jnp
from jax.experimental import pallas as pl
from jax.experimental.pallas import tpu as pltpu

LANES = 128
SUBLANES = 8


def _mse_vs_one_kernel(x_ref, o_ref, acc_ref, *, inv_n, n_elems, tile_rows,
                       needs_mask):
    """Accumulate vreg-shaped partials of (x-1)^2; finalize mean on last step."""
    i = pl.program_id(0)

    @pl.when(i == 0)
    def _():
        acc_ref[...] = jnp.zeros_like(acc_ref)

    d = x_ref[...].astype(jnp.float32) - 1.0
    d2 = d * d

    if needs_mask:
        # Global element index of each block entry; zero anything past the true
        # element count (sub-row tail pad and/or partial last block).
        row = jax.lax.broadcasted_iota(jnp.int32, (tile_rows, LANES), 0)
        lane = jax.lax.broadcasted_iota(jnp.int32, (tile_rows, LANES), 1)
        g = (i * tile_rows + row) * LANES + lane
        d2 = jnp.where(g < n_elems, d2, 0.0)

    if tile_rows % SUBLANES == 0:
        # Elementwise (VALU) accumulate of (8,128) partials; no per-step
        # cross-lane reduce or scalar RMW on the critical path.
        part = d2.reshape(tile_rows // SUBLANES, SUBLANES, LANES).sum(axis=0)
        acc_ref[...] += part
    else:
        # Tiny-input fallback (block == full array with < 8 / odd rows).
        acc_ref[0, 0] += jnp.sum(d2)

    @pl.when(i == pl.num_programs(0) - 1)
    def _():
        total = jnp.sum(acc_ref[...])  # single XLU reduction at the very end
        o_ref[...] = jnp.reshape(total * inv_n, (1, 1))


def gan_loss(patch_scores, *, row_tile=2048):
    """Pallas implementation of F.mse_loss(patch_scores, ones_like(patch_scores))."""
    x = patch_scores
    n_elems = int(x.size)

    # Flatten; only pad the final partial lane-row (< 128 elems) if unaligned.
    flat = x.reshape(-1)
    pad = (-flat.shape[0]) % LANES
    if pad:
        flat = jnp.pad(flat, (0, pad))  # value irrelevant: masked in-kernel
    x2d = flat.reshape(-1, LANES)
    rows = x2d.shape[0]

    assert row_tile % SUBLANES == 0, "row_tile must be a multiple of 8"
    tile_rows = row_tile if rows >= row_tile else rows  # full-extent for tiny inputs
    num_blocks = pl.cdiv(rows, tile_rows)
    # Mask needed whenever the grid covers more elements than actually exist.
    needs_mask = (num_blocks * tile_rows * LANES) != n_elems

    kernel = functools.partial(
        _mse_vs_one_kernel,
        inv_n=1.0 / float(n_elems),
        n_elems=n_elems,
        tile_rows=tile_rows,
        needs_mask=needs_mask,
    )

    out = pl.pallas_call(
        kernel,
        out_shape=jax.ShapeDtypeStruct((1, 1), jnp.float32),
        grid_spec=pltpu.PrefetchScalarGridSpec(
            num_scalar_prefetch=0,
            grid=(num_blocks,),
            in_specs=[pl.BlockSpec((tile_rows, LANES), lambda i: (i, 0))],
            out_specs=pl.BlockSpec((1, 1), lambda i: (0, 0)),
            scratch_shapes=[pltpu.VMEM((SUBLANES, LANES), jnp.float32)],
        ),
        compiler_params=pltpu.CompilerParams(
            dimension_semantics=("arbitrary",),
        ),
        cost_estimate=pl.CostEstimate(
            flops=2 * n_elems,
            bytes_accessed=n_elems * x.dtype.itemsize + 4,
            transcendentals=0,
        ),
    )(x2d)

    return out[0, 0]


if __name__ == "__main__":
    key = jax.random.PRNGKey(0)
    # patch_scores as produced by a PatchGAN discriminator: [N, C, H, W]
    patch_scores = jax.random.normal(key, (2, 4, 16, 16), dtype=jnp.float32)

    loss = gan_loss(patch_scores)
    jax.block_until_ready(loss)
    ref = jnp.mean((patch_scores - 1.0) ** 2)
    assert jnp.allclose(loss, ref, rtol=1e-6, atol=1e-6), (loss, ref)

    # Unaligned shape exercises the in-kernel tail-masking path (no 1.0 pad).
    ps2 = jax.random.normal(jax.random.PRNGKey(1), (2, 3, 7, 5), dtype=jnp.float32)
    loss2 = gan_loss(ps2)
    jax.block_until_ready(loss2)
    ref2 = jnp.mean((ps2 - 1.0) ** 2)
    assert jnp.allclose(loss2, ref2, rtol=1e-6, atol=1e-6), (loss2, ref2)

    print("KERNEL_OK")
</pallas_src>

<mosaic_0001>
module attributes {stable_mosaic.version = 11 : i64} {
  func.func @_mse_vs_one_kernel(%arg0: i32, %arg1: memref<16x128xf32, #tpu.memory_space<vmem>>, %arg2: memref<1x1xf32, #tpu.memory_space<vmem>>, %arg3: memref<8x128xf32, #tpu.memory_space<vmem>>) attributes {dimension_semantics = [#tpu.dimension_semantics<arbitrary>], iteration_bounds = array<i64: 1>, scalar_prefetch = 0 : i64, scratch_operands = 1 : i64, tpu.core_type = #tpu.core_type<tc>, window_params = [{transform_indices = @transform_0, window_bounds = array<i64: 16, 128>}, {pipeline_mode = #tpu.pipeline_mode<synchronous>, transform_indices = @transform_1, window_bounds = array<i64: 1, 1>}]} {
    %c0_i32 = arith.constant 0 : i32
    %0 = arith.cmpi eq, %arg0, %c0_i32 : i32
    %1 = arith.extui %0 : i1 to i32
    %c0_i32_0 = arith.constant 0 : i32
    %2 = arith.cmpi ne, %1, %c0_i32_0 : i32
    scf.if %2 {
      %cst_9 = arith.constant 0.000000e+00 : f32
      %15 = vector.broadcast %cst_9 : f32 to vector<8x128xf32>
      %c0_10 = arith.constant 0 : index
      %c0_11 = arith.constant 0 : index
      %16 = vector.load %arg3[%c0_10, %c0_11] : memref<8x128xf32, #tpu.memory_space<vmem>>, vector<8x128xf32>
      tpu.vector_store %arg3[%c0_10, %c0_11], %15 {strides = array<i32>} : memref<8x128xf32, #tpu.memory_space<vmem>>, vector<8x128xf32>,
    } else {
    }
    %c0 = arith.constant 0 : index
    %c0_1 = arith.constant 0 : index
    %3 = vector.load %arg1[%c0, %c0_1] : memref<16x128xf32, #tpu.memory_space<vmem>>, vector<16x128xf32>
    %cst = arith.constant 1.000000e+00 : f32
    %4 = vector.broadcast %cst : f32 to vector<16x128xf32>
    %5 = arith.subf %3, %4 : vector<16x128xf32>
    %6 = arith.mulf %5, %5 : vector<16x128xf32>
    %7 = vector.shape_cast %6 : vector<16x128xf32> to vector<2x8x128xf32>
    %cst_2 = arith.constant dense<0.000000e+00> : vector<8x128xf32>
    %8 = vector.multi_reduction <add>, %7, %cst_2 [0] : vector<2x8x128xf32> to vector<8x128xf32>
    %c0_3 = arith.constant 0 : index
    %c0_4 = arith.constant 0 : index
    %9 = vector.load %arg3[%c0_3, %c0_4] : memref<8x128xf32, #tpu.memory_space<vmem>>, vector<8x128xf32>
    %10 = arith.addf %9, %8 : vector<8x128xf32>
    %c0_5 = arith.constant 0 : index
    %c0_6 = arith.constant 0 : index
    %11 = vector.load %arg3[%c0_5, %c0_6] : memref<8x128xf32, #tpu.memory_space<vmem>>, vector<8x128xf32>
    tpu.vector_store %arg3[%c0_5, %c0_6], %10 {strides = array<i32>} : memref<8x128xf32, #tpu.memory_space<vmem>>, vector<8x128xf32>,
    %c0_i32_7 = arith.constant 0 : i32
    %12 = arith.cmpi eq, %arg0, %c0_i32_7 : i32
    %13 = arith.extui %12 : i1 to i32
    %c0_i32_8 = arith.constant 0 : i32
    %14 = arith.cmpi ne, %13, %c0_i32_8 : i32
    scf.if %14 {
      %c0_9 = arith.constant 0 : index
      %c0_10 = arith.constant 0 : index
      %15 = vector.load %arg3[%c0_9, %c0_10] : memref<8x128xf32, #tpu.memory_space<vmem>>, vector<8x128xf32>
      %16 = vector.shape_cast %15 : vector<8x128xf32> to vector<1x8x128xf32>
      %cst_11 = arith.constant dense<0.000000e+00> : vector<1xf32>
      %17 = vector.multi_reduction <add>, %16, %cst_11 [1, 2] : vector<1x8x128xf32> to vector<1xf32>
      %18 = vector.shape_cast %17 : vector<1xf32> to vector<1x1x1xf32>
      %19 = vector.extract %18[0, 0, 0] : f32 from vector<1x1x1xf32>
      %cst_12 = arith.constant 4.8828125E-4 : f32
      %20 = arith.mulf %19, %cst_12 : f32
      %21 = vector.broadcast %20 : f32 to vector<1x1xf32>
      %c0_13 = arith.constant 0 : index
      %c0_14 = arith.constant 0 : index
      %22 = vector.load %arg2[%c0_13, %c0_14] : memref<1x1xf32, #tpu.memory_space<vmem>>, vector<1x1xf32>
      tpu.vector_store %arg2[%c0_13, %c0_14], %21 {strides = array<i32>} : memref<1x1xf32, #tpu.memory_space<vmem>>, vector<1x1xf32>,
    } else {
    }
    return
  }
  func.func @transform_0(%arg0: i32) -> (i32, i32) {
    %c0_i32 = arith.constant 0 : i32
    %c0_i32_0 = arith.constant 0 : i32
    return %arg0, %c0_i32 : i32, i32
  }
  func.func @transform_1(%arg0: i32) -> (i32, i32) {
    %c0_i32 = arith.constant 0 : i32
    %c0_i32_0 = arith.constant 0 : i32
    %c0_i32_1 = arith.constant 0 : i32
    return %c0_i32, %c0_i32_0 : i32, i32
  }
}

</mosaic_0001>

<llo_original>
// kernel: tpu_custom_call.1
$region0: #{tpu_custom_call.1}
  #allocation0 [shape = 'u32[]', space=smem, size = 0x4, offset = 0x4, fixed_abs, tag = 'smem constant byte address 0x4 - core index']
  #allocation1 [shape = 'u32[144,128]{1,0:T(1,128)}', space=vmem, size = 0x12000, scoped, tag = 'internal scratch']
  #allocation2 [shape = 'f32[8,128]{1,0:T(8,128)}', space=vmem, size = 0x1000, scoped, tag = 'scratch operand']
  %s0 = inlined_call_operand.hbm [shape: f32[16,128], index: 0, kind: input, shape index: {}]
  %s1 = inlined_call_operand.hbm [shape: f32[1,1], index: 1, kind: output, shape index: {}]
  %s2 = sld [smem:[#allocation0]]
  $region26: #{tpu_custom_call.1} parent=0
    _
  %s4 = ssub.s32 1, %s2
  %s5 = scalar_select 0, %s4, %s2
  $region1: #{tpu_custom_call.1} parent=0
    #allocation3 [shape = 'u8[8192]{0}', space=vmem, size = 0x2000, scoped, tag = 'input window, operand 0, single buffered']
    #allocation4 [shape = 's32[1]{0}', space=sflag, size = 0x4, scoped, tag = 'scoped memory for tpu_custom_call.1']
    #allocation5 [shape = 's32[1]{0}', space=sflag, size = 0x4, scoped, tag = 'scoped memory for tpu_custom_call.1']
    #allocation6 [shape = 'u8[512]{0}', space=vmem, size = 0x400, scoped, tag = 'output window, operand 0, single buffered']
    %6 = vsyncpa [#allocation4], 0
    %7 = vsyncpa [#allocation5], 0
    // Predicated region
    $region2: #{tpu_custom_call.1} parent=1 // pred_check
      _
    $region3: #{tpu_custom_call.1} parent=1 // pred_check_branch
      %9 = sbr.rel (0) target = $region5
    $region4: #{tpu_custom_call.1} parent=1 // pred_region
      %s11 = ssub.s32 256, 256
      %12 = vsyncadd [#allocation4], %s11
      %s13 = sshll.u32 [#allocation3], 4
      %s14 = int_to_ptr.vmem [resolvable:$true] %s13
      %19 = dma.hbm_to_vmem [thread:$0]  %s0, 256, %s14, [#allocation4], 128, 128, 8
    $region5: #{tpu_custom_call.1} parent=1 // pred_fallthru
      _
    // Predicated region
    $region6: #{tpu_custom_call.1} parent=1 // pred_check
      _
    $region7: #{tpu_custom_call.1} parent=1 // pred_check_branch
      %21 = sbr.rel (0) target = $region9
    $region8: #{tpu_custom_call.1} parent=1 // pred_region
      %22 = dma.done [#allocation4], 256
    $region9: #{tpu_custom_call.1} parent=1 // pred_fallthru
      _
    %p23 = scmp.eq.s32.totalorder 0, 0
    // Predicated region
    $region10: #{tpu_custom_call.1} parent=1 // pred_check
      %p24 = pneg %p23
    $region11: #{tpu_custom_call.1} parent=1 // pred_check_branch
      %26 = sbr.rel (%p24) target = $region13
    $region12: #{tpu_custom_call.1} parent=1 // pred_region
      %27 = vst [vmem:[#allocation2] sm:$0xff] 0.0
    $region13: #{tpu_custom_call.1} parent=1 // pred_fallthru
      _
    %v28 = vld [vmem:[#allocation3] sm:$0xff]
    %v29 = vld [vmem:[#allocation3 + $0x8] sm:$0xff]
    %v30 = vsub.f32 %v28, 1.0
    %v31 = vsub.f32 %v29, 1.0
    %v32 = vmul.f32 %v30, %v30
    %v33 = vmul.f32 %v31, %v31
    %v34 = vadd.f32 %v32, %v33
    %v35 = vld [vmem:[#allocation2] sm:$0xff]
    %v36 = vadd.f32 %v35, %v34
    %37 = vst [vmem:[#allocation2] sm:$0xff] %v36
    // Predicated region
    $region14: #{tpu_custom_call.1} parent=1 // pred_check
      %p38 = pneg %p23
    $region15: #{tpu_custom_call.1} parent=1 // pred_check_branch
      %40 = sbr.rel (%p38) target = $region17
    $region16: #{tpu_custom_call.1} parent=1 // pred_region
      %v41 = vld [vmem:[#allocation2] sm:$0xff]
      %42 = vadd.xlane.f32.xlu0 %v41
      %v43 = vpop.xlane.xlu0 %42
      %v44 = vrot.slane %v43, 4
      %v45 = vadd.f32 %v43, %v44
      %v46 = vrot.slane %v45, 2
      %v47 = vadd.f32 %v45, %v46
      %v48 = vrot.slane %v47, 1
      %v49 = vadd.f32 %v47, %v48
      %s50 = vtos %v49
      %s51 = smul.f32 %s50, 0.00048828125
      %v52 = vstv %s51
      %vm53 = vcmask 0
      %54 = vst.msk [vmem:[#allocation6] sm:$0x1] %vm53, %v52
    $region17: #{tpu_custom_call.1} parent=1 // pred_fallthru
      _
    // Predicated region
    $region18: #{tpu_custom_call.1} parent=1 // pred_check
      _
    $region19: #{tpu_custom_call.1} parent=1 // pred_check_branch
      %56 = sbr.rel (0) target = $region21
    $region20: #{tpu_custom_call.1} parent=1 // pred_region
      %s58 = ssub.s32 16, 16
      %59 = vsyncadd [#allocation5], %s58
      %s61 = sshll.u32 [#allocation6], 4
      %s62 = int_to_ptr.vmem [resolvable:$true] %s61
      %64 = dma.vmem_to_hbm [thread:$0]  %s62, 16, %s1, [#allocation5]
    $region21: #{tpu_custom_call.1} parent=1 // pred_fallthru
      _
    // Predicated region
    $region22: #{tpu_custom_call.1} parent=1 // pred_check
      _
    $region23: #{tpu_custom_call.1} parent=1 // pred_check_branch
      %66 = sbr.rel (0) target = $region25
    $region24: #{tpu_custom_call.1} parent=1 // pred_region
      %67 = dma.done [#allocation5], 16
    $region25: #{tpu_custom_call.1} parent=1 // pred_fallthru
      _
    %68 = vsyncpa [#allocation4], 1
    %69 = vsyncpa [#allocation5], 1

</llo_original>
